<compile_context>
chip_gen: v7x
topology: tpu7x:2x2x1
jax: 0.10.0
libtpu: 0.0.40
codegen_flags: <defaults>
</compile_context>

<pallas_src>
import numpy as np

import jax
import jax.numpy as jnp
from jax.experimental import pallas as pl
from jax.experimental.pallas import tpu as pltpu

EPS = 1e-5


# ---------------------------------------------------------------------------
# Fused kernel
# ---------------------------------------------------------------------------
def _residual_block_kernel(x_ref, w1_ref, w2_ref, amean_ref,
                           g1_ref, be1_ref, g2_ref, be2_ref,
                           o_ref, pad_ref):
    """Fused ResidualBlock forward.

    x_ref    : [H, L]        f32   input, L = N*W*C (batch/width/channel on lanes)
    w?_ref   : [3, L, L]     bf16  kx-folded, batch-block-diagonal row-conv weights
    amean_ref: [L, L]        f32   channel-averaging matrix, pre-scaled by 1/(N*H*W)
    g?,be?   : [1, L]        f32   BN gamma / beta tiled over N and W
    o_ref    : [H, L]        f32   output
    pad_ref  : [H+2, L]      bf16  top/bottom replication-padded scratch (reused)
    """
    h = x_ref.shape[0]

    def fill_pad(img_f32):
        # cast once; top/bottom rows replicate the first/last image row.
        img = img_f32.astype(jnp.bfloat16)
        pad_ref[1:h + 1, :] = img
        pad_ref[0:1, :] = img[0:1, :]
        pad_ref[h + 1:h + 2, :] = img[h - 1:h, :]

    def conv3x3(wk_ref):                            # -> [H, L] f32
        acc = None
        for ky in range(3):                         # 3 row taps (kx folded into W)
            part = jnp.dot(pad_ref[ky:ky + h, :], wk_ref[ky],
                           preferred_element_type=jnp.float32)
            acc = part if acc is None else acc + part
        return acc

    def batchnorm(y, g, be):                        # y: [H, L], training-mode BN
        s1 = jnp.sum(y, axis=0, keepdims=True)      # [1, L]
        s2 = jnp.sum(y * y, axis=0, keepdims=True)  # [1, L]
        stats = jnp.concatenate([s1, s2], axis=0)   # [2, L] -> one stats matmul
        folded = jnp.dot(stats, amean_ref[...],
                         preferred_element_type=jnp.float32)
        mean = folded[0:1, :]
        var = folded[1:2, :] - mean * mean
        scale = g * jax.lax.rsqrt(var + EPS)
        shift = be - mean * scale
        return y * scale + shift

    x = x_ref[...]                                  # [H, L] f32

    # ---- stage 1: pad -> conv1 -> BN1 -> ReLU ------------------------------
    fill_pad(x)
    y1 = jnp.maximum(batchnorm(conv3x3(w1_ref), g1_ref[...], be1_ref[...]), 0.0)

    # ---- stage 2: pad -> conv2 -> BN2 -> +residual -> ReLU -----------------
    fill_pad(y1)                                    # scratch is reused
    y2 = batchnorm(conv3x3(w2_ref), g2_ref[...], be2_ref[...])
    o_ref[...] = jnp.maximum(y2 + x, 0.0)


# ---------------------------------------------------------------------------
# Wrapper (NCHW in / NCHW out, like the PyTorch module)
# ---------------------------------------------------------------------------
@jax.jit
def residual_block(x_nchw, kernel_params):
    n, c, h, width = x_nchw.shape
    lanes = n * width * c
    w1, w2, amean, g1, be1, g2, be2 = kernel_params

    # NCHW -> [H, N*W*C]   (batch, width, channel folded onto the lane axis)
    x2 = jnp.transpose(x_nchw, (2, 0, 3, 1)).reshape(h, lanes).astype(jnp.float32)

    out = pl.pallas_call(
        _residual_block_kernel,
        out_shape=jax.ShapeDtypeStruct((h, lanes), jnp.float32),
        in_specs=[pl.BlockSpec(memory_space=pltpu.MemorySpace.VMEM)] * 8,
        out_specs=pl.BlockSpec(memory_space=pltpu.MemorySpace.VMEM),
        scratch_shapes=[pltpu.VMEM((h + 2, lanes), jnp.bfloat16)],
    )(x2, w1, w2, amean, g1, be1, g2, be2)

    # [H, N*W*C] -> NCHW
    return jnp.transpose(out.reshape(h, n, width, c), (1, 3, 0, 2))


# ---------------------------------------------------------------------------
# Parameter construction
# ---------------------------------------------------------------------------
def init_torch_params(key, channels):
    """PyTorch-layout parameters (conv weights pre-rounded to bf16 so the
    kernel and the reference use bit-identical weight values)."""
    k1, k2, k3, k4 = jax.random.split(key, 4)
    bound = 1.0 / (channels * 9) ** 0.5

    def conv_w(k):
        w = jax.random.uniform(k, (channels, channels, 3, 3), jnp.float32,
                               -bound, bound)
        return w.astype(jnp.bfloat16).astype(jnp.float32)

    w1, w2 = conv_w(k1), conv_w(k2)
    b1 = jax.random.uniform(k3, (channels,), jnp.float32, -bound, bound)
    b2 = jax.random.uniform(k4, (channels,), jnp.float32, -bound, bound)
    ones = jnp.ones((channels,), jnp.float32)
    zeros = jnp.zeros((channels,), jnp.float32)
    return (w1, b1, ones, zeros, w2, b2, ones, zeros)


def _make_folded_conv_weights(wt, width, n_batch):
    """[Cout, Cin, 3, 3] -> [3, N*W*Cin, N*W*Cout] (bf16).

    kx (left/right replication) padding is folded into the band structure:
    the out-of-range tap at x=-1 / x=W is clamped onto column 0 / W-1 and
    ADDED into that band.  The per-image [W*Cin, W*Cout] matrix is then
    placed block-diagonally over the batch (batch lives on the lane axis).
    """
    co, ci = wt.shape[0], wt.shape[1]
    wt = np.asarray(wt, np.float32)
    small = np.zeros((3, width * ci, width * co), np.float32)
    for ky in range(3):
        for kx in range(3):
            blk = wt[:, :, ky, kx].T                           # [Cin, Cout]
            for xo in range(width):
                xi = min(max(xo + kx - 1, 0), width - 1)       # replication clamp
                small[ky, xi * ci:(xi + 1) * ci,
                      xo * co:(xo + 1) * co] += blk
    big = np.zeros((3, n_batch * width * ci, n_batch * width * co), np.float32)
    for b in range(n_batch):
        big[:, b * width * ci:(b + 1) * width * ci,
            b * width * co:(b + 1) * width * co] = small
    return jnp.asarray(big, jnp.bfloat16)


def prepare_kernel_params(torch_params, n, height, width):
    w1, _b1, g1, be1, w2, _b2, g2, be2 = torch_params
    c = w1.shape[0]
    lanes = n * width * c

    # channel-averaging matrix (lane i holds channel i % C), pre-scaled by
    # 1/(N*H*W).  Kept in f32: the scale is not exactly representable in bf16.
    idx = np.arange(lanes)
    amean = (idx[:, None] % c == idx[None, :] % c).astype(np.float32)
    amean /= float(n * height * width)

    def tile(v):  # per-channel [C] -> lane layout [1, N*W*C]
        return jnp.asarray(np.tile(np.asarray(v, np.float32), n * width)[None, :])

    # NOTE: conv biases _b1/_b2 cancel exactly under training-mode BatchNorm
    # (the batch mean absorbs them), so they are not passed to the kernel.
    return (_make_folded_conv_weights(w1, width, n),
            _make_folded_conv_weights(w2, width, n),
            jnp.asarray(amean), tile(g1), tile(be1), tile(g2), tile(be2))


# ---------------------------------------------------------------------------
# Pure-JAX reference (NCHW, f32, training-mode BN) matching the PyTorch module
# ---------------------------------------------------------------------------
def reference_forward(x, torch_params):
    w1, b1, g1, be1, w2, b2, g2, be2 = torch_params

    def conv(x, wt, b):
        xp = jnp.pad(x, ((0, 0), (0, 0), (1, 1), (1, 1)), mode="edge")
        y = jax.lax.conv_general_dilated(
            xp, wt, (1, 1), "VALID",
            dimension_numbers=("NCHW", "OIHW", "NCHW"),
            precision=jax.lax.Precision.HIGHEST)
        return y + b.reshape(1, -1, 1, 1)

    def bn(x, g, be):
        m = jnp.mean(x, axis=(0, 2, 3), keepdims=True)
        v = jnp.mean((x - m) ** 2, axis=(0, 2, 3), keepdims=True)
        return (g.reshape(1, -1, 1, 1) * (x - m) * jax.lax.rsqrt(v + EPS)
                + be.reshape(1, -1, 1, 1))

    out = jax.nn.relu(bn(conv(x, w1, b1), g1, be1))
    out = bn(conv(out, w2, b2), g2, be2)
    return jax.nn.relu(out + x)


# ---------------------------------------------------------------------------
if __name__ == "__main__":
    N, C, H, W = 2, 4, 16, 16          # lanes = N*W*C = 128
    key = jax.random.PRNGKey(0)
    kx, kp = jax.random.split(key)

    x = jax.random.normal(kx, (N, C, H, W), jnp.float32)
    torch_params = init_torch_params(kp, C)
    kernel_params = prepare_kernel_params(torch_params, N, H, W)

    out = jax.block_until_ready(residual_block(x, kernel_params))
    ref = reference_forward(x, torch_params)

    assert out.shape == (N, C, H, W)
    max_err = float(jnp.max(jnp.abs(out - ref)))
    assert jnp.allclose(out, ref, atol=2e-2, rtol=2e-2), f"max abs err {max_err}"

    print("KERNEL_OK")
</pallas_src>

<mosaic_0001>
module attributes {stable_mosaic.version = 11 : i64} {
  func.func @_residual_block_kernel(%arg0: memref<16x128xf32, #tpu.memory_space<vmem>>, %arg1: memref<3x128x128xbf16, #tpu.memory_space<vmem>>, %arg2: memref<3x128x128xbf16, #tpu.memory_space<vmem>>, %arg3: memref<128x128xf32, #tpu.memory_space<vmem>>, %arg4: memref<1x128xf32, #tpu.memory_space<vmem>>, %arg5: memref<1x128xf32, #tpu.memory_space<vmem>>, %arg6: memref<1x128xf32, #tpu.memory_space<vmem>>, %arg7: memref<1x128xf32, #tpu.memory_space<vmem>>, %arg8: memref<16x128xf32, #tpu.memory_space<vmem>>, %arg9: memref<18x128xbf16, #tpu.memory_space<vmem>>) attributes {dimension_semantics = [], scalar_prefetch = 0 : i64, scratch_operands = 1 : i64, tpu.core_type = #tpu.core_type<tc>} {
    %c0 = arith.constant 0 : index
    %c0_0 = arith.constant 0 : index
    %0 = vector.load %arg0[%c0, %c0_0] : memref<16x128xf32, #tpu.memory_space<vmem>>, vector<16x128xf32>
    %1 = arith.truncf %0 : vector<16x128xf32> to vector<16x128xbf16>
    %c1 = arith.constant 1 : index
    %c0_1 = arith.constant 0 : index
    %2 = vector.load %arg9[%c1, %c0_1] : memref<18x128xbf16, #tpu.memory_space<vmem>>, vector<16x128xbf16>
    tpu.vector_store %arg9[%c1, %c0_1], %1 {strides = array<i32>} : memref<18x128xbf16, #tpu.memory_space<vmem>>, vector<16x128xbf16>,
    %3 = vector.extract_strided_slice %1 {offsets = [0, 0], sizes = [1, 128], strides = [1, 1]} : vector<16x128xbf16> to vector<1x128xbf16>
    %c0_2 = arith.constant 0 : index
    %c0_3 = arith.constant 0 : index
    %4 = vector.load %arg9[%c0_2, %c0_3] : memref<18x128xbf16, #tpu.memory_space<vmem>>, vector<1x128xbf16>
    tpu.vector_store %arg9[%c0_2, %c0_3], %3 {strides = array<i32>} : memref<18x128xbf16, #tpu.memory_space<vmem>>, vector<1x128xbf16>,
    %5 = vector.extract_strided_slice %1 {offsets = [15, 0], sizes = [1, 128], strides = [1, 1]} : vector<16x128xbf16> to vector<1x128xbf16>
    %c17 = arith.constant 17 : index
    %c0_4 = arith.constant 0 : index
    %6 = vector.load %arg9[%c17, %c0_4] : memref<18x128xbf16, #tpu.memory_space<vmem>>, vector<1x128xbf16>
    tpu.vector_store %arg9[%c17, %c0_4], %5 {strides = array<i32>} : memref<18x128xbf16, #tpu.memory_space<vmem>>, vector<1x128xbf16>,
    %c0_5 = arith.constant 0 : index
    %c0_6 = arith.constant 0 : index
    %7 = vector.load %arg9[%c0_5, %c0_6] : memref<18x128xbf16, #tpu.memory_space<vmem>>, vector<16x128xbf16>
    %c0_7 = arith.constant 0 : index
    %c0_8 = arith.constant 0 : index
    %c0_9 = arith.constant 0 : index
    %8 = vector.load %arg1[%c0_7, %c0_8, %c0_9] : memref<3x128x128xbf16, #tpu.memory_space<vmem>>, vector<1x128x128xbf16>
    %9 = vector.shape_cast %8 : vector<1x128x128xbf16> to vector<128x128xbf16>
    %cst = arith.constant dense<0.000000e+00> : vector<16x128xf32>
    %10 = tpu.matmul %7, %9, %cst {dimension_numbers = #tpu.dot_dimension_numbers<[1], [0], [0], [1], [0, 0, 1, 1], [], []>} : vector<16x128xbf16>, vector<128x128xbf16>, vector<16x128xf32> -> vector<16x128xf32>
    %c1_10 = arith.constant 1 : index
    %c0_11 = arith.constant 0 : index
    %11 = vector.load %arg9[%c1_10, %c0_11] : memref<18x128xbf16, #tpu.memory_space<vmem>>, vector<16x128xbf16>
    %c1_12 = arith.constant 1 : index
    %c0_13 = arith.constant 0 : index
    %c0_14 = arith.constant 0 : index
    %12 = vector.load %arg1[%c1_12, %c0_13, %c0_14] : memref<3x128x128xbf16, #tpu.memory_space<vmem>>, vector<1x128x128xbf16>
    %13 = vector.shape_cast %12 : vector<1x128x128xbf16> to vector<128x128xbf16>
    %cst_15 = arith.constant dense<0.000000e+00> : vector<16x128xf32>
    %14 = tpu.matmul %11, %13, %cst_15 {dimension_numbers = #tpu.dot_dimension_numbers<[1], [0], [0], [1], [0, 0, 1, 1], [], []>} : vector<16x128xbf16>, vector<128x128xbf16>, vector<16x128xf32> -> vector<16x128xf32>
    %15 = arith.addf %10, %14 : vector<16x128xf32>
    %c2 = arith.constant 2 : index
    %c0_16 = arith.constant 0 : index
    %16 = vector.load %arg9[%c2, %c0_16] : memref<18x128xbf16, #tpu.memory_space<vmem>>, vector<16x128xbf16>
    %c2_17 = arith.constant 2 : index
    %c0_18 = arith.constant 0 : index
    %c0_19 = arith.constant 0 : index
    %17 = vector.load %arg1[%c2_17, %c0_18, %c0_19] : memref<3x128x128xbf16, #tpu.memory_space<vmem>>, vector<1x128x128xbf16>
    %18 = vector.shape_cast %17 : vector<1x128x128xbf16> to vector<128x128xbf16>
    %cst_20 = arith.constant dense<0.000000e+00> : vector<16x128xf32>
    %19 = tpu.matmul %16, %18, %cst_20 {dimension_numbers = #tpu.dot_dimension_numbers<[1], [0], [0], [1], [0, 0, 1, 1], [], []>} : vector<16x128xbf16>, vector<128x128xbf16>, vector<16x128xf32> -> vector<16x128xf32>
    %20 = arith.addf %15, %19 : vector<16x128xf32>
    %c0_21 = arith.constant 0 : index
    %c0_22 = arith.constant 0 : index
    %21 = vector.load %arg4[%c0_21, %c0_22] : memref<1x128xf32, #tpu.memory_space<vmem>>, vector<1x128xf32>
    %c0_23 = arith.constant 0 : index
    %c0_24 = arith.constant 0 : index
    %22 = vector.load %arg5[%c0_23, %c0_24] : memref<1x128xf32, #tpu.memory_space<vmem>>, vector<1x128xf32>
    %cst_25 = arith.constant dense<0.000000e+00> : vector<128xf32>
    %23 = vector.multi_reduction <add>, %20, %cst_25 [0] : vector<16x128xf32> to vector<128xf32>
    %24 = vector.shape_cast %23 : vector<128xf32> to vector<1x128xf32>
    %25 = arith.mulf %20, %20 : vector<16x128xf32>
    %cst_26 = arith.constant dense<0.000000e+00> : vector<128xf32>
    %26 = vector.multi_reduction <add>, %25, %cst_26 [0] : vector<16x128xf32> to vector<128xf32>
    %27 = vector.shape_cast %26 : vector<128xf32> to vector<1x128xf32>
    %28 = tpu.concatenate %24, %27 in 0 : vector<1x128xf32>, vector<1x128xf32> -> vector<2x128xf32>
    %c0_27 = arith.constant 0 : index
    %c0_28 = arith.constant 0 : index
    %29 = vector.load %arg3[%c0_27, %c0_28] : memref<128x128xf32, #tpu.memory_space<vmem>>, vector<128x128xf32>
    %cst_29 = arith.constant dense<0.000000e+00> : vector<2x128xf32>
    %30 = tpu.matmul %28, %29, %cst_29 {dimension_numbers = #tpu.dot_dimension_numbers<[1], [0], [0], [1], [0, 0, 1, 1], [], []>} : vector<2x128xf32>, vector<128x128xf32>, vector<2x128xf32> -> vector<2x128xf32>
    %31 = vector.extract_strided_slice %30 {offsets = [0, 0], sizes = [1, 128], strides = [1, 1]} : vector<2x128xf32> to vector<1x128xf32>
    %32 = vector.extract_strided_slice %30 {offsets = [1, 0], sizes = [1, 128], strides = [1, 1]} : vector<2x128xf32> to vector<1x128xf32>
    %33 = arith.mulf %31, %31 : vector<1x128xf32>
    %34 = arith.subf %32, %33 : vector<1x128xf32>
    %cst_30 = arith.constant 9.99999974E-6 : f32
    %35 = vector.broadcast %cst_30 : f32 to vector<1x128xf32>
    %36 = arith.addf %34, %35 : vector<1x128xf32>
    %37 = math.rsqrt %36 : vector<1x128xf32>
    %38 = arith.mulf %21, %37 : vector<1x128xf32>
    %39 = arith.mulf %31, %38 : vector<1x128xf32>
    %40 = arith.subf %22, %39 : vector<1x128xf32>
    %41 = vector.broadcast %38 : vector<1x128xf32> to vector<16x128xf32>
    %42 = arith.mulf %20, %41 : vector<16x128xf32>
    %43 = vector.broadcast %40 : vector<1x128xf32> to vector<16x128xf32>
    %44 = arith.addf %42, %43 : vector<16x128xf32>
    %cst_31 = arith.constant 0.000000e+00 : f32
    %45 = vector.broadcast %cst_31 : f32 to vector<16x128xf32>
    %46 = arith.maximumf %44, %45 : vector<16x128xf32>
    %47 = arith.truncf %46 : vector<16x128xf32> to vector<16x128xbf16>
    %c1_32 = arith.constant 1 : index
    %c0_33 = arith.constant 0 : index
    %48 = vector.load %arg9[%c1_32, %c0_33] : memref<18x128xbf16, #tpu.memory_space<vmem>>, vector<16x128xbf16>
    tpu.vector_store %arg9[%c1_32, %c0_33], %47 {strides = array<i32>} : memref<18x128xbf16, #tpu.memory_space<vmem>>, vector<16x128xbf16>,
    %49 = vector.extract_strided_slice %47 {offsets = [0, 0], sizes = [1, 128], strides = [1, 1]} : vector<16x128xbf16> to vector<1x128xbf16>
    %c0_34 = arith.constant 0 : index
    %c0_35 = arith.constant 0 : index
    %50 = vector.load %arg9[%c0_34, %c0_35] : memref<18x128xbf16, #tpu.memory_space<vmem>>, vector<1x128xbf16>
    tpu.vector_store %arg9[%c0_34, %c0_35], %49 {strides = array<i32>} : memref<18x128xbf16, #tpu.memory_space<vmem>>, vector<1x128xbf16>,
    %51 = vector.extract_strided_slice %47 {offsets = [15, 0], sizes = [1, 128], strides = [1, 1]} : vector<16x128xbf16> to vector<1x128xbf16>
    %c17_36 = arith.constant 17 : index
    %c0_37 = arith.constant 0 : index
    %52 = vector.load %arg9[%c17_36, %c0_37] : memref<18x128xbf16, #tpu.memory_space<vmem>>, vector<1x128xbf16>
    tpu.vector_store %arg9[%c17_36, %c0_37], %51 {strides = array<i32>} : memref<18x128xbf16, #tpu.memory_space<vmem>>, vector<1x128xbf16>,
    %c0_38 = arith.constant 0 : index
    %c0_39 = arith.constant 0 : index
    %53 = vector.load %arg9[%c0_38, %c0_39] : memref<18x128xbf16, #tpu.memory_space<vmem>>, vector<16x128xbf16>
    %c0_40 = arith.constant 0 : index
    %c0_41 = arith.constant 0 : index
    %c0_42 = arith.constant 0 : index
    %54 = vector.load %arg2[%c0_40, %c0_41, %c0_42] : memref<3x128x128xbf16, #tpu.memory_space<vmem>>, vector<1x128x128xbf16>
    %55 = vector.shape_cast %54 : vector<1x128x128xbf16> to vector<128x128xbf16>
    %cst_43 = arith.constant dense<0.000000e+00> : vector<16x128xf32>
    %56 = tpu.matmul %53, %55, %cst_43 {dimension_numbers = #tpu.dot_dimension_numbers<[1], [0], [0], [1], [0, 0, 1, 1], [], []>} : vector<16x128xbf16>, vector<128x128xbf16>, vector<16x128xf32> -> vector<16x128xf32>
    %c1_44 = arith.constant 1 : index
    %c0_45 = arith.constant 0 : index
    %57 = vector.load %arg9[%c1_44, %c0_45] : memref<18x128xbf16, #tpu.memory_space<vmem>>, vector<16x128xbf16>
    %c1_46 = arith.constant 1 : index
    %c0_47 = arith.constant 0 : index
    %c0_48 = arith.constant 0 : index
    %58 = vector.load %arg2[%c1_46, %c0_47, %c0_48] : memref<3x128x128xbf16, #tpu.memory_space<vmem>>, vector<1x128x128xbf16>
    %59 = vector.shape_cast %58 : vector<1x128x128xbf16> to vector<128x128xbf16>
    %cst_49 = arith.constant dense<0.000000e+00> : vector<16x128xf32>
    %60 = tpu.matmul %57, %59, %cst_49 {dimension_numbers = #tpu.dot_dimension_numbers<[1], [0], [0], [1], [0, 0, 1, 1], [], []>} : vector<16x128xbf16>, vector<128x128xbf16>, vector<16x128xf32> -> vector<16x128xf32>
    %61 = arith.addf %56, %60 : vector<16x128xf32>
    %c2_50 = arith.constant 2 : index
    %c0_51 = arith.constant 0 : index
    %62 = vector.load %arg9[%c2_50, %c0_51] : memref<18x128xbf16, #tpu.memory_space<vmem>>, vector<16x128xbf16>
    %c2_52 = arith.constant 2 : index
    %c0_53 = arith.constant 0 : index
    %c0_54 = arith.constant 0 : index
    %63 = vector.load %arg2[%c2_52, %c0_53, %c0_54] : memref<3x128x128xbf16, #tpu.memory_space<vmem>>, vector<1x128x128xbf16>
    %64 = vector.shape_cast %63 : vector<1x128x128xbf16> to vector<128x128xbf16>
    %cst_55 = arith.constant dense<0.000000e+00> : vector<16x128xf32>
    %65 = tpu.matmul %62, %64, %cst_55 {dimension_numbers = #tpu.dot_dimension_numbers<[1], [0], [0], [1], [0, 0, 1, 1], [], []>} : vector<16x128xbf16>, vector<128x128xbf16>, vector<16x128xf32> -> vector<16x128xf32>
    %66 = arith.addf %61, %65 : vector<16x128xf32>
    %c0_56 = arith.constant 0 : index
    %c0_57 = arith.constant 0 : index
    %67 = vector.load %arg6[%c0_56, %c0_57] : memref<1x128xf32, #tpu.memory_space<vmem>>, vector<1x128xf32>
    %c0_58 = arith.constant 0 : index
    %c0_59 = arith.constant 0 : index
    %68 = vector.load %arg7[%c0_58, %c0_59] : memref<1x128xf32, #tpu.memory_space<vmem>>, vector<1x128xf32>
    %cst_60 = arith.constant dense<0.000000e+00> : vector<128xf32>
    %69 = vector.multi_reduction <add>, %66, %cst_60 [0] : vector<16x128xf32> to vector<128xf32>
    %70 = vector.shape_cast %69 : vector<128xf32> to vector<1x128xf32>
    %71 = arith.mulf %66, %66 : vector<16x128xf32>
    %cst_61 = arith.constant dense<0.000000e+00> : vector<128xf32>
    %72 = vector.multi_reduction <add>, %71, %cst_61 [0] : vector<16x128xf32> to vector<128xf32>
    %73 = vector.shape_cast %72 : vector<128xf32> to vector<1x128xf32>
    %74 = tpu.concatenate %70, %73 in 0 : vector<1x128xf32>, vector<1x128xf32> -> vector<2x128xf32>
    %c0_62 = arith.constant 0 : index
    %c0_63 = arith.constant 0 : index
    %75 = vector.load %arg3[%c0_62, %c0_63] : memref<128x128xf32, #tpu.memory_space<vmem>>, vector<128x128xf32>
    %cst_64 = arith.constant dense<0.000000e+00> : vector<2x128xf32>
    %76 = tpu.matmul %74, %75, %cst_64 {dimension_numbers = #tpu.dot_dimension_numbers<[1], [0], [0], [1], [0, 0, 1, 1], [], []>} : vector<2x128xf32>, vector<128x128xf32>, vector<2x128xf32> -> vector<2x128xf32>
    %77 = vector.extract_strided_slice %76 {offsets = [0, 0], sizes = [1, 128], strides = [1, 1]} : vector<2x128xf32> to vector<1x128xf32>
    %78 = vector.extract_strided_slice %76 {offsets = [1, 0], sizes = [1, 128], strides = [1, 1]} : vector<2x128xf32> to vector<1x128xf32>
    %79 = arith.mulf %77, %77 : vector<1x128xf32>
    %80 = arith.subf %78, %79 : vector<1x128xf32>
    %cst_65 = arith.constant 9.99999974E-6 : f32
    %81 = vector.broadcast %cst_65 : f32 to vector<1x128xf32>
    %82 = arith.addf %80, %81 : vector<1x128xf32>
    %83 = math.rsqrt %82 : vector<1x128xf32>
    %84 = arith.mulf %67, %83 : vector<1x128xf32>
    %85 = arith.mulf %77, %84 : vector<1x128xf32>
    %86 = arith.subf %68, %85 : vector<1x128xf32>
    %87 = vector.broadcast %84 : vector<1x128xf32> to vector<16x128xf32>
    %88 = arith.mulf %66, %87 : vector<16x128xf32>
    %89 = vector.broadcast %86 : vector<1x128xf32> to vector<16x128xf32>
    %90 = arith.addf %88, %89 : vector<16x128xf32>
    %91 = arith.addf %90, %0 : vector<16x128xf32>
    %cst_66 = arith.constant 0.000000e+00 : f32
    %92 = vector.broadcast %cst_66 : f32 to vector<16x128xf32>
    %93 = arith.maximumf %91, %92 : vector<16x128xf32>
    %c0_67 = arith.constant 0 : index
    %c0_68 = arith.constant 0 : index
    %94 = vector.load %arg8[%c0_67, %c0_68] : memref<16x128xf32, #tpu.memory_space<vmem>>, vector<16x128xf32>
    tpu.vector_store %arg8[%c0_67, %c0_68], %93 {strides = array<i32>} : memref<16x128xf32, #tpu.memory_space<vmem>>, vector<16x128xf32>,
    return
  }
}

</mosaic_0001>

<llo_original>
// kernel: residual_block.1
$region0: #{residual_block.1}
  #allocation0 [shape = 'u32[]', space=smem, size = 0x4, offset = 0x4, fixed_abs, tag = 'smem constant byte address 0x4 - core index']
  #allocation1 [shape = 'u32[144,128]{1,0:T(1,128)}', space=vmem, size = 0x12000, scoped, tag = 'internal scratch']
  #allocation2 [shape = 'bf16[18,128]{1,0:T(8,128)(2,1)}', space=vmem, size = 0x1800, scoped, tag = 'scratch operand']
  %s0 = inlined_call_operand.vmem [shape: f32[16,128], index: 0, kind: input, shape index: {}]
  %s1 = inlined_call_operand.vmem [shape: bf16[3,128,128], index: 1, kind: input, shape index: {}]
  %s2 = inlined_call_operand.vmem [shape: bf16[3,128,128], index: 2, kind: input, shape index: {}]
  %s3 = inlined_call_operand.hbm [shape: f32[128,128], index: 3, kind: input, shape index: {}]
  %s4 = inlined_call_operand.vmem [shape: f32[1,128], index: 4, kind: input, shape index: {}]
  %s5 = inlined_call_operand.vmem [shape: f32[1,128], index: 5, kind: input, shape index: {}]
  %s6 = inlined_call_operand.vmem [shape: f32[1,128], index: 6, kind: input, shape index: {}]
  %s7 = inlined_call_operand.vmem [shape: f32[1,128], index: 7, kind: input, shape index: {}]
  %s8 = inlined_call_operand.vmem [shape: f32[16,128], index: 8, kind: output, shape index: {}]
  %s9 = sld [smem:[#allocation0]]
  $region46: #{residual_block.1} parent=0
    _
  %s11 = ssub.s32 1, %s9
  %s12 = scalar_select 0, %s11, %s9
  $region1: #{residual_block.1} parent=0
    #allocation3 [shape = 'u8[65536]{0}', space=vmem, size = 0x10000, scoped, tag = 'input window, operand 3, single buffered']
    #allocation4 [shape = 's32[1]{0}', space=sflag, size = 0x4, scoped, tag = 'scoped memory for residual_block.1']
    %13 = vsyncpa [#allocation4], 0
    // Predicated region
    $region2: #{residual_block.1} parent=1 // pred_check
      _
    $region3: #{residual_block.1} parent=1 // pred_check_branch
      %15 = sbr.rel (0) target = $region5
    $region4: #{residual_block.1} parent=1 // pred_region
      _
    $region5: #{residual_block.1} parent=1 // pred_fallthru
      _
    // Predicated region
    $region6: #{residual_block.1} parent=1 // pred_check
      _
    $region7: #{residual_block.1} parent=1 // pred_check_branch
      %17 = sbr.rel (0) target = $region9
    $region8: #{residual_block.1} parent=1 // pred_region
      _
    $region9: #{residual_block.1} parent=1 // pred_fallthru
      _
    // Predicated region
    $region10: #{residual_block.1} parent=1 // pred_check
      _
    $region11: #{residual_block.1} parent=1 // pred_check_branch
      %19 = sbr.rel (0) target = $region13
    $region12: #{residual_block.1} parent=1 // pred_region
      _
    $region13: #{residual_block.1} parent=1 // pred_fallthru
      _
    // Predicated region
    $region14: #{residual_block.1} parent=1 // pred_check
      _
    $region15: #{residual_block.1} parent=1 // pred_check_branch
      %21 = sbr.rel (0) target = $region17
    $region16: #{residual_block.1} parent=1 // pred_region
      %s23 = ssub.s32 2048, 2048
      %24 = vsyncadd [#allocation4], %s23
      %s25 = sshll.u32 [#allocation3], 4
      %s26 = int_to_ptr.vmem [resolvable:$true] %s25
      %31 = dma.hbm_to_vmem [thread:$0]  %s3, 2048, %s26, [#allocation4], 128, 128, 8
    $region17: #{residual_block.1} parent=1 // pred_fallthru
      _
    // Predicated region
    $region18: #{residual_block.1} parent=1 // pred_check
      _
    $region19: #{residual_block.1} parent=1 // pred_check_branch
      %33 = sbr.rel (0) target = $region21
    $region20: #{residual_block.1} parent=1 // pred_region
      _
    $region21: #{residual_block.1} parent=1 // pred_fallthru
      _
    // Predicated region
    $region22: #{residual_block.1} parent=1 // pred_check
      _
    $region23: #{residual_block.1} parent=1 // pred_check_branch
      %35 = sbr.rel (0) target = $region25
    $region24: #{residual_block.1} parent=1 // pred_region
      _
    $region25: #{residual_block.1} parent=1 // pred_fallthru
      _
    // Predicated region
    $region26: #{residual_block.1} parent=1 // pred_check
      _
    $region27: #{residual_block.1} parent=1 // pred_check_branch
      %37 = sbr.rel (0) target = $region29
    $region28: #{residual_block.1} parent=1 // pred_region
      _
    $region29: #{residual_block.1} parent=1 // pred_fallthru
      _
    // Predicated region
    $region30: #{residual_block.1} parent=1 // pred_check
      _
    $region31: #{residual_block.1} parent=1 // pred_check_branch
      %39 = sbr.rel (0) target = $region33
    $region32: #{residual_block.1} parent=1 // pred_region
      _
    $region33: #{residual_block.1} parent=1 // pred_fallthru
      _
    // Predicated region
    $region34: #{residual_block.1} parent=1 // pred_check
      _
    $region35: #{residual_block.1} parent=1 // pred_check_branch
      %41 = sbr.rel (0) target = $region37
    $region36: #{residual_block.1} parent=1 // pred_region
      %42 = dma.done [#allocation4], 2048
    $region37: #{residual_block.1} parent=1 // pred_fallthru
      _
    %v44 = vld [vmem:[%s0] sm:$0xff]
    %v45 = vld [vmem:[%s0 + $0x8] sm:$0xff]
    %v46 = vpack.c.bf16 %v45, %v44
    %v48 = vunpack.c.l.b16 %v46
    %v49 = vunpack.c.h.b16 %v46
    %v50 = vpack.c.b16 %v48, %v48
    %v51 = vpack.c.b16 %v49, %v49
    %vm52 = vsmask.f32 256
    %vm53 = vsmask.f32 4368
    %vm54 = vmor %vm52, %vm53
    %v56 = vshrl.u32 %v50, 16
    %v58 = vrot.slane %v56, 7
    %v59 = vshll.u32 %v50, 16
    %v61 = vor.u32 %v58, %v59
    %v62 = vrot.slane %v58, 4
    %v64 = vshrl.u32 %v51, 16
    %v66 = vrot.slane %v64, 7
    %v67 = vshll.u32 %v51, 16
    %v69 = vor.u32 %v66, %v67
    %v70 = vsel %vm54, %v62, %v69
    %v71 = vrot.slane %v66, 4
    %vm75 = vcmask 1043456
    %vm76 = vsmask.f32 7938
    %vm77 = vmand %vm75, %vm76
    %v78 = vld [vmem:[#allocation2] sm:$0xf]
    %v79 = vsel %vm77, %v61, %v78
    %80 = vst [vmem:[#allocation2] sm:$0xf] %v79
    %81 = vst [vmem:[#allocation2 + $0x4] sm:$0xf] %v70
    %vm82 = vcmask 1040384
    %vm83 = vmand %vm82, %vm52
    %v84 = vld [vmem:[#allocation2 + $0x8] sm:$0x1]
    %v85 = vsel %vm83, %v71, %v84
    %86 = vst [vmem:[#allocation2 + $0x8] sm:$0x1] %v85
    %v87 = vld [vmem:[#allocation2] sm:$0x1]
    %v88 = vsel %vm83, %v46, %v87
    %89 = vst [vmem:[#allocation2] sm:$0x1] %v88
    %v90 = vrot.slane %v51, 7
    %v91 = vrot.slane %v90, 4
    %vm93 = vmand %vm82, %vm76
    %v94 = vld [vmem:[#allocation2 + $0x8] sm:$0x1]
    %v95 = vsel %vm93, %v91, %v94
    %96 = vst [vmem:[#allocation2 + $0x8] sm:$0x1] %v95
    %v97 = vld [vmem:[#allocation2] sm:$0xf]
    %v98 = vld [vmem:[#allocation2 + $0x4] sm:$0xf]
    %v99 = vld [vmem:[%s1] sm:$0xf]
    %v100 = vld [vmem:[%s1 + $0x4] sm:$0xf]
    %v101 = vld [vmem:[%s1 + $0x8] sm:$0xf]
    %v102 = vld [vmem:[%s1 + $0xc] sm:$0xf]
    %v103 = vld [vmem:[%s1 + $0x10] sm:$0xf]
    %v104 = vld [vmem:[%s1 + $0x14] sm:$0xf]
    %v105 = vld [vmem:[%s1 + $0x18] sm:$0xf]
    %v106 = vld [vmem:[%s1 + $0x1c] sm:$0xf]
    %v107 = vld [vmem:[%s1 + $0x20] sm:$0xf]
    %v108 = vld [vmem:[%s1 + $0x24] sm:$0xf]
    %v109 = vld [vmem:[%s1 + $0x28] sm:$0xf]
    %v110 = vld [vmem:[%s1 + $0x2c] sm:$0xf]
    %v111 = vld [vmem:[%s1 + $0x30] sm:$0xf]
    %v112 = vld [vmem:[%s1 + $0x34] sm:$0xf]
    %v113 = vld [vmem:[%s1 + $0x38] sm:$0xf]
    %v114 = vld [vmem:[%s1 + $0x3c] sm:$0xf]
    %v115 = vld [vmem:[#allocation2 + $0x8] sm:$0x1]
    %s116 = scalar_lea.vmem %s1, 64
    %v117 = vld [vmem:[%s116] sm:$0xf]
    %v118 = vld [vmem:[%s116 + $0x4] sm:$0xf]
    %v119 = vld [vmem:[%s116 + $0x8] sm:$0xf]
    %v120 = vld [vmem:[%s116 + $0xc] sm:$0xf]
    %v121 = vld [vmem:[%s116 + $0x10] sm:$0xf]
    %v122 = vld [vmem:[%s116 + $0x14] sm:$0xf]
    %v123 = vld [vmem:[%s116 + $0x18] sm:$0xf]
    %v124 = vld [vmem:[%s116 + $0x1c] sm:$0xf]
    %v125 = vld [vmem:[%s116 + $0x20] sm:$0xf]
    %v126 = vld [vmem:[%s116 + $0x24] sm:$0xf]
    %v127 = vld [vmem:[%s116 + $0x28] sm:$0xf]
    %v128 = vld [vmem:[%s116 + $0x2c] sm:$0xf]
    %v129 = vld [vmem:[%s116 + $0x30] sm:$0xf]
    %v130 = vld [vmem:[%s116 + $0x34] sm:$0xf]
    %v131 = vld [vmem:[%s116 + $0x38] sm:$0xf]
    %v132 = vld [vmem:[%s116 + $0x3c] sm:$0xf]
    %v136 = vunpack.c.l.b16 %v97
    %v137 = vunpack.c.l.b16 %v98
    %v138 = vunpack.c.l.b16 %v115
    %v139 = vpack.c.b16 %v137, %v136
    %v140 = vpack.c.b16 %v138, %v138
    %vm141 = vsmask.f32 7424
    %v143 = vshrl.u32 %v139, 16
    %v145 = vshll.u32 %v139, 16
    %v147 = vrot.slane %v145, 1
    %v148 = vor.u32 %v143, %v147
    %v150 = vshll.u32 %v140, 16
    %v152 = vrot.slane %v150, 1
    %v153 = vsel %vm141, %v148, %v152
    %v171 = vunpack.c.l.b16 %v117
    %v172 = vunpack.c.l.b16 %v118
    %v173 = vunpack.c.l.b16 %v119
    %v174 = vunpack.c.l.b16 %v120
    %v175 = vunpack.c.l.b16 %v121
    %v176 = vunpack.c.l.b16 %v122
    %v177 = vunpack.c.l.b16 %v123
    %v178 = vunpack.c.l.b16 %v124
    %v179 = vunpack.c.l.b16 %v125
    %v180 = vunpack.c.l.b16 %v126
    %v181 = vunpack.c.l.b16 %v127
    %v182 = vunpack.c.l.b16 %v128
    %v183 = vunpack.c.l.b16 %v129
    %v184 = vunpack.c.l.b16 %v130
    %v185 = vunpack.c.l.b16 %v131
    %v186 = vunpack.c.l.b16 %v132
    %v187 = vpack.c.b16 %v172, %v171
    %v188 = vpack.c.b16 %v174, %v173
    %v189 = vpack.c.b16 %v176, %v175
    %v190 = vpack.c.b16 %v178, %v177
    %v191 = vpack.c.b16 %v180, %v179
    %v192 = vpack.c.b16 %v182, %v181
    %v193 = vpack.c.b16 %v184, %v183
    %v194 = vpack.c.b16 %v186, %v185
    %203 = vmatprep.subr.bf16.mxu0 0
    %204 = vmatpush1.bf16.msra.mxu0 %v187
    %205 = vmatprep.subr.bf16.mxu0 0
    %206 = vmatpush1.bf16.msra.mxu0 %v188
    %207 = vmatprep.subr.bf16.mxu0 0
    %208 = vmatpush1.bf16.msra.mxu0 %v189
    %209 = vmatprep.subr.bf16.mxu0 0
    %210 = vmatpush1.bf16.msra.mxu0 %v190
    %211 = vmatprep.subr.bf16.mxu0 0
    %212 = vmatpush1.bf16.msra.mxu0 %v191
    %213 = vmatprep.subr.bf16.mxu0 0
    %214 = vmatpush1.bf16.msra.mxu0 %v192
    %215 = vmatprep.subr.bf16.mxu0 0
    %216 = vmatpush1.bf16.msra.mxu0 %v193
    %217 = vmatprep.subr.bf16.mxu0 0
    %218 = vmatpush1.bf16.msra.mxu0 %v194
    %219 = vmatprep.subr.bf16.mxu0 0
    %220 = vmatpush1.bf16.msra.mxu0 0
    %221 = vmatprep.subr.bf16.mxu0 0
    %222 = vmatpush1.bf16.msra.mxu0 0
    %223 = vmatprep.subr.bf16.mxu0 0
    %224 = vmatpush1.bf16.msra.mxu0 0
    %225 = vmatprep.subr.bf16.mxu0 0
    %226 = vmatpush1.bf16.msra.mxu0 0
    %227 = vmatprep.subr.bf16.mxu0 0
    %228 = vmatpush1.bf16.msra.mxu0 0
    %229 = vmatprep.subr.bf16.mxu0 0
    %230 = vmatpush1.bf16.msra.mxu0 0
    %231 = vmatprep.subr.bf16.mxu0 0
    %232 = vmatpush1.bf16.msra.mxu0 0
    %233 = vmatprep.subr.bf16.mxu0 0
    %234 = vmatpush1.bf16.msra.mxu0 0
    %235 = vmatprep.mubr.bf16.mxu0 0
    %236 = vmatmul.mubr.bf16.gmra.mrb[0].mxu0 %v153
    %v237 = vpop.f32.mrb[0].mxu0
    %v238 = vadd.f32 0.0, %v237
    %v239 = vpop.f32.mrb[0].mxu0
    %v240 = vpop.f32.mrb[0].mxu0
    %v241 = vadd.f32 0.0, %v240
    %v242 = vpop.f32.mrb[0].mxu0
    %243 = vdwg.mxu0
    %v261 = vunpack.c.l.b16 %v99
    %v262 = vunpack.c.l.b16 %v100
    %v263 = vunpack.c.l.b16 %v101
    %v264 = vunpack.c.l.b16 %v102
    %v265 = vunpack.c.l.b16 %v103
    %v266 = vunpack.c.l.b16 %v104
    %v267 = vunpack.c.l.b16 %v105
    %v268 = vunpack.c.l.b16 %v106
    %v269 = vunpack.c.l.b16 %v107
    %v270 = vunpack.c.l.b16 %v108
    %v271 = vunpack.c.l.b16 %v109
    %v272 = vunpack.c.l.b16 %v110
    %v273 = vunpack.c.l.b16 %v111
    %v274 = vunpack.c.l.b16 %v112
    %v275 = vunpack.c.l.b16 %v113
    %v276 = vunpack.c.l.b16 %v114
    %v277 = vpack.c.b16 %v262, %v261
    %v278 = vpack.c.b16 %v264, %v263
    %v279 = vpack.c.b16 %v266, %v265
    %v280 = vpack.c.b16 %v268, %v267
    %v281 = vpack.c.b16 %v270, %v269
    %v282 = vpack.c.b16 %v272, %v271
    %v283 = vpack.c.b16 %v274, %v273
    %v284 = vpack.c.b16 %v276, %v275
    %293 = vmatprep.subr.bf16.mxu0 0
    %294 = vmatpush1.bf16.msra.mxu0 %v277
    %295 = vmatprep.subr.bf16.mxu0 0
    %296 = vmatpush1.bf16.msra.mxu0 %v278
    %297 = vmatprep.subr.bf16.mxu0 0
    %298 = vmatpush1.bf16.msra.mxu0 %v279
    %299 = vmatprep.subr.bf16.mxu0 0
    %300 = vmatpush1.bf16.msra.mxu0 %v280
    %301 = vmatprep.subr.bf16.mxu0 0
    %302 = vmatpush1.bf16.msra.mxu0 %v281
    %303 = vmatprep.subr.bf16.mxu0 0
    %304 = vmatpush1.bf16.msra.mxu0 %v282
    %305 = vmatprep.subr.bf16.mxu0 0
    %306 = vmatpush1.bf16.msra.mxu0 %v283
    %307 = vmatprep.subr.bf16.mxu0 0
    %308 = vmatpush1.bf16.msra.mxu0 %v284
    %309 = vmatprep.subr.bf16.mxu0 0
    %310 = vmatpush1.bf16.msra.mxu0 0
    %311 = vmatprep.subr.bf16.mxu0 0
    %312 = vmatpush1.bf16.msra.mxu0 0
    %313 = vmatprep.subr.bf16.mxu0 0
    %314 = vmatpush1.bf16.msra.mxu0 0
    %315 = vmatprep.subr.bf16.mxu0 0
    %316 = vmatpush1.bf16.msra.mxu0 0
    %317 = vmatprep.subr.bf16.mxu0 0
    %318 = vmatpush1.bf16.msra.mxu0 0
    %319 = vmatprep.subr.bf16.mxu0 0
    %320 = vmatpush1.bf16.msra.mxu0 0
    %321 = vmatprep.subr.bf16.mxu0 0
    %322 = vmatpush1.bf16.msra.mxu0 0
    %323 = vmatprep.subr.bf16.mxu0 0
    %324 = vmatpush1.bf16.msra.mxu0 0
    %325 = vmatprep.mubr.bf16.mxu0 0
    %326 = vmatmul.mubr.bf16.gmra.mrb[0].mxu0 %v139
    %v327 = vpop.f32.mrb[0].mxu0
    %v328 = vadd.f32 %v238, %v327
    %v329 = vpop.f32.mrb[0].mxu0
    %v330 = vpop.f32.mrb[0].mxu0
    %v331 = vadd.f32 %v241, %v330
    %v332 = vpop.f32.mrb[0].mxu0
    %333 = vdwg.mxu0
    %v334 = vld [vmem:[#allocation2] sm:$0xe]
    %s335 = scalar_lea.vmem %s1, 128
    %v336 = vld [vmem:[%s335] sm:$0xf]
    %v337 = vld [vmem:[%s335 + $0x4] sm:$0xf]
    %v338 = vld [vmem:[%s335 + $0x8] sm:$0xf]
    %v339 = vld [vmem:[%s335 + $0xc] sm:$0xf]
    %v340 = vld [vmem:[%s335 + $0x10] sm:$0xf]
    %v341 = vld [vmem:[%s335 + $0x14] sm:$0xf]
    %v342 = vld [vmem:[%s335 + $0x18] sm:$0xf]
    %v343 = vld [vmem:[%s335 + $0x1c] sm:$0xf]
    %v344 = vld [vmem:[%s335 + $0x20] sm:$0xf]
    %v345 = vld [vmem:[%s335 + $0x24] sm:$0xf]
    %v346 = vld [vmem:[%s335 + $0x28] sm:$0xf]
    %v347 = vld [vmem:[%s335 + $0x2c] sm:$0xf]
    %v348 = vld [vmem:[%s335 + $0x30] sm:$0xf]
    %v349 = vld [vmem:[%s335 + $0x34] sm:$0xf]
    %v350 = vld [vmem:[%s335 + $0x38] sm:$0xf]
    %v351 = vld [vmem:[%s335 + $0x3c] sm:$0xf]
    %v353 = vunpack.c.l.b16 %v334
    %v354 = vpack.c.b16 %v137, %v353
    %vm355 = vcmask 1046528
    %v356 = vrot.slane %v354, 1
    %v357 = vrot.slane %v140, 1
    %v358 = vsel %vm355, %v356, %v357
    %v376 = vunpack.c.l.b16 %v336
    %v377 = vunpack.c.l.b16 %v337
    %v378 = vunpack.c.l.b16 %v338
    %v379 = vunpack.c.l.b16 %v339
    %v380 = vunpack.c.l.b16 %v340
    %v381 = vunpack.c.l.b16 %v341
    %v382 = vunpack.c.l.b16 %v342
    %v383 = vunpack.c.l.b16 %v343
    %v384 = vunpack.c.l.b16 %v344
    %v385 = vunpack.c.l.b16 %v345
    %v386 = vunpack.c.l.b16 %v346
    %v387 = vunpack.c.l.b16 %v347
    %v388 = vunpack.c.l.b16 %v348
    %v389 = vunpack.c.l.b16 %v349
    %v390 = vunpack.c.l.b16 %v350
    %v391 = vunpack.c.l.b16 %v351
    %v392 = vpack.c.b16 %v377, %v376
    %v393 = vpack.c.b16 %v379, %v378
    %v394 = vpack.c.b16 %v381, %v380
    %v395 = vpack.c.b16 %v383, %v382
    %v396 = vpack.c.b16 %v385, %v384
    %v397 = vpack.c.b16 %v387, %v386
    %v398 = vpack.c.b16 %v389, %v388
    %v399 = vpack.c.b16 %v391, %v390
    %408 = vmatprep.subr.bf16.mxu0 0
    %409 = vmatpush1.bf16.msra.mxu0 %v392
    %410 = vmatprep.subr.bf16.mxu0 0
    %411 = vmatpush1.bf16.msra.mxu0 %v393
    %412 = vmatprep.subr.bf16.mxu0 0
    %413 = vmatpush1.bf16.msra.mxu0 %v394
    %414 = vmatprep.subr.bf16.mxu0 0
    %415 = vmatpush1.bf16.msra.mxu0 %v395
    %416 = vmatprep.subr.bf16.mxu0 0
    %417 = vmatpush1.bf16.msra.mxu0 %v396
    %418 = vmatprep.subr.bf16.mxu0 0
    %419 = vmatpush1.bf16.msra.mxu0 %v397
    %420 = vmatprep.subr.bf16.mxu0 0
    %421 = vmatpush1.bf16.msra.mxu0 %v398
    %422 = vmatprep.subr.bf16.mxu0 0
    %423 = vmatpush1.bf16.msra.mxu0 %v399
    %424 = vmatprep.subr.bf16.mxu0 0
    %425 = vmatpush1.bf16.msra.mxu0 0
    %426 = vmatprep.subr.bf16.mxu0 0
    %427 = vmatpush1.bf16.msra.mxu0 0
    %428 = vmatprep.subr.bf16.mxu0 0
    %429 = vmatpush1.bf16.msra.mxu0 0
    %430 = vmatprep.subr.bf16.mxu0 0
    %431 = vmatpush1.bf16.msra.mxu0 0
    %432 = vmatprep.subr.bf16.mxu0 0
    %433 = vmatpush1.bf16.msra.mxu0 0
    %434 = vmatprep.subr.bf16.mxu0 0
    %435 = vmatpush1.bf16.msra.mxu0 0
    %436 = vmatprep.subr.bf16.mxu0 0
    %437 = vmatpush1.bf16.msra.mxu0 0
    %438 = vmatprep.subr.bf16.mxu0 0
    %439 = vmatpush1.bf16.msra.mxu0 0
    %440 = vmatprep.mubr.bf16.mxu0 0
    %441 = vmatmul.mubr.bf16.gmra.mrb[0].mxu0 %v358
    %v442 = vpop.f32.mrb[0].mxu0
    %v443 = vadd.f32 0.0, %v442
    %v444 = vpop.f32.mrb[0].mxu0
    %v445 = vpop.f32.mrb[0].mxu0
    %v446 = vadd.f32 0.0, %v445
    %v447 = vpop.f32.mrb[0].mxu0
    %448 = vdwg.mxu0
    %v449 = vadd.f32 %v328, %v443
    %v450 = vadd.f32 %v331, %v446
    %v451 = vld [vmem:[%s4] sm:$0x1]
    %v452 = vld [vmem:[%s5] sm:$0x1]
    %v453 = vadd.f32 %v449, %v450
    %v454 = vrot.slane %v453, 4
    %v455 = vadd.f32 %v453, %v454
    %v456 = vrot.slane %v455, 2
    %v457 = vadd.f32 %v455, %v456
    %v458 = vrot.slane %v457, 1
    %v459 = vadd.f32 %v457, %v458
    %v460 = vmul.f32 %v449, %v449
    %v461 = vmul.f32 %v450, %v450
    %v462 = vadd.f32 %v460, %v461
    %v463 = vrot.slane %v462, 4
    %v464 = vadd.f32 %v462, %v463
    %v465 = vrot.slane %v464, 2
    %v466 = vadd.f32 %v464, %v465
    %v467 = vrot.slane %v466, 1
    %v468 = vadd.f32 %v466, %v467
    %vm469 = vcmask 1040384
    %v470 = vsel %vm469, %v459, %v468
    %v471 = vld [vmem:[#allocation3] sm:$0xff]
    %v472 = vld [vmem:[#allocation3 + $0x8] sm:$0xff]
    %v473 = vld [vmem:[#allocation3 + $0x10] sm:$0xff]
    %v474 = vld [vmem:[#allocation3 + $0x18] sm:$0xff]
    %v475 = vld [vmem:[#allocation3 + $0x20] sm:$0xff]
    %v476 = vld [vmem:[#allocation3 + $0x28] sm:$0xff]
    %v477 = vld [vmem:[#allocation3 + $0x30] sm:$0xff]
    %v478 = vld [vmem:[#allocation3 + $0x38] sm:$0xff]
    %v479 = vld [vmem:[#allocation3 + $0x40] sm:$0xff]
    %v480 = vld [vmem:[#allocation3 + $0x48] sm:$0xff]
    %v481 = vld [vmem:[#allocation3 + $0x50] sm:$0xff]
    %v482 = vld [vmem:[#allocation3 + $0x58] sm:$0xff]
    %v483 = vld [vmem:[#allocation3 + $0x60] sm:$0xff]
    %v484 = vld [vmem:[#allocation3 + $0x68] sm:$0xff]
    %v485 = vld [vmem:[#allocation3 + $0x70] sm:$0xff]
    %v486 = vld [vmem:[#allocation3 + $0x78] sm:$0xff]
    %487 = vmatprep.subr.mxu0 0.0
    %488 = vmatpush1.msra.mxu0 %v471
    %489 = vmatprep.subr.mxu0 0.0
    %490 = vmatpush1.msra.mxu0 %v472
    %491 = vmatprep.subr.mxu0 0.0
    %492 = vmatpush1.msra.mxu0 %v473
    %493 = vmatprep.subr.mxu0 0.0
    %494 = vmatpush1.msra.mxu0 %v474
    %495 = vmatprep.subr.mxu0 0.0
    %496 = vmatpush1.msra.mxu0 %v475
    %497 = vmatprep.subr.mxu0 0.0
    %498 = vmatpush1.msra.mxu0 %v476
    %499 = vmatprep.subr.mxu0 0.0
    %500 = vmatpush1.msra.mxu0 %v477
    %501 = vmatprep.subr.mxu0 0.0
    %502 = vmatpush1.msra.mxu0 %v478
    %503 = vmatprep.subr.mxu0 0.0
    %504 = vmatpush1.msra.mxu0 %v479
    %505 = vmatprep.subr.mxu0 0.0
    %506 = vmatpush1.msra.mxu0 %v480
    %507 = vmatprep.subr.mxu0 0.0
    %508 = vmatpush1.msra.mxu0 %v481
    %509 = vmatprep.subr.mxu0 0.0
    %510 = vmatpush1.msra.mxu0 %v482
    %511 = vmatprep.subr.mxu0 0.0
    %512 = vmatpush1.msra.mxu0 %v483
    %513 = vmatprep.subr.mxu0 0.0
    %514 = vmatpush1.msra.mxu0 %v484
    %515 = vmatprep.subr.mxu0 0.0
    %516 = vmatpush1.msra.mxu0 %v485
    %517 = vmatprep.subr.mxu0 0.0
    %518 = vmatpush1.msra.mxu0 %v486
    %519 = vmatprep.subr.mxu0 0.0
    %520 = vmatpush1.msra.mxu0 0.0
    %521 = vmatprep.subr.mxu0 0.0
    %522 = vmatpush1.msra.mxu0 0.0
    %523 = vmatprep.subr.mxu0 0.0
    %524 = vmatpush1.msra.mxu0 0.0
    %525 = vmatprep.subr.mxu0 0.0
    %526 = vmatpush1.msra.mxu0 0.0
    %527 = vmatprep.subr.mxu0 0.0
    %528 = vmatpush1.msra.mxu0 0.0
    %529 = vmatprep.subr.mxu0 0.0
    %530 = vmatpush1.msra.mxu0 0.0
    %531 = vmatprep.subr.mxu0 0.0
    %532 = vmatpush1.msra.mxu0 0.0
    %533 = vmatprep.subr.mxu0 0.0
    %534 = vmatpush1.msra.mxu0 0.0
    %535 = vmatprep.subr.mxu0 0.0
    %536 = vmatpush1.msra.mxu0 0.0
    %537 = vmatprep.subr.mxu0 0.0
    %538 = vmatpush1.msra.mxu0 0.0
    %539 = vmatprep.subr.mxu0 0.0
    %540 = vmatpush1.msra.mxu0 0.0
    %541 = vmatprep.subr.mxu0 0.0
    %542 = vmatpush1.msra.mxu0 0.0
    %543 = vmatprep.subr.mxu0 0.0
    %544 = vmatpush1.msra.mxu0 0.0
    %545 = vmatprep.subr.mxu0 0.0
    %546 = vmatpush1.msra.mxu0 0.0
    %547 = vmatprep.subr.mxu0 0.0
    %548 = vmatpush1.msra.mxu0 0.0
    %549 = vmatprep.subr.mxu0 0.0
    %550 = vmatpush1.msra.mxu0 0.0
    %551 = vmatprep.mubr.f32.mxu0 0.0
    %552 = vmatmul.mubr.f32.gmra.mrb[0].mxu0 %v470
    %v553 = vpop.f32.mrb[0].mxu0
    %v554 = vadd.f32 0.0, %v553
    %v555 = vpop.f32.mrb[0].mxu0
    %556 = vdwg.mxu0
    %v557 = vmul.f32 %v554, %v554
    %v559 = vrot.slane %v557, 7
    %v561 = vsub.f32 %v554, %v559
    %v562 = vadd.f32 %v561, 1e-05
    %v563 = vrsqrt.pop %v562
    %v566 = vunpack.c.l.s4 1966171168
    %v567 = vunpack.c.0.s8 %v566
    %v568 = vlaneseq
    %v569 = vshrl.u32 %v568, 7
    %v570 = vsub.s32 %v567, %v569
    %v571 = vrot.slane %v563, %v570
    %v572 = vcombine.high %v571, %v571
    %v574 = vunpack.c.l.s4 1966171168
    %v575 = vunpack.c.0.s8 %v574
    %v576 = vlaneseq
    %v577 = vshrl.u32 %v576, 7
    %v578 = vsub.s32 %v575, %v577
    %v579 = vrot.slane %v572, %v578
    %v581 = vmul.f32 %v451, %v579
    %v582 = vmul.f32 %v554, %v581
    %v583 = vsub.f32 %v452, %v582
    %v585 = vlaneseq
    %v586 = vshrl.u32 %v585, 7
    %v587 = vsub.s32 0, %v586
    %v588 = vrot.slane %v581, %v587
    %v590 = vmul.f32 %v449, %v588
    %v591 = vmul.f32 %v450, %v588
    %v593 = vlaneseq
    %v594 = vshrl.u32 %v593, 7
    %v595 = vsub.s32 0, %v594
    %v596 = vrot.slane %v583, %v595
    %v598 = vadd.f32 %v590, %v596
    %v599 = vadd.f32 %v591, %v596
    %v600 = vmax.f32 %v598, 0.0
    %v601 = vmax.f32 %v599, 0.0
    %v602 = vpack.c.bf16 %v601, %v600
    %v604 = vunpack.c.l.b16 %v602
    %v605 = vunpack.c.h.b16 %v602
    %v606 = vpack.c.b16 %v604, %v604
    %v607 = vpack.c.b16 %v605, %v605
    %v609 = vshrl.u32 %v606, 16
    %v611 = vrot.slane %v609, 7
    %v612 = vshll.u32 %v606, 16
    %v614 = vor.u32 %v611, %v612
    %v615 = vrot.slane %v611, 4
    %v617 = vshrl.u32 %v607, 16
    %v619 = vrot.slane %v617, 7
    %v620 = vshll.u32 %v607, 16
    %v622 = vor.u32 %v619, %v620
    %v623 = vsel %vm54, %v615, %v622
    %v624 = vrot.slane %v619, 4
    %v628 = vld [vmem:[#allocation2] sm:$0xf]
    %v629 = vsel %vm77, %v614, %v628
    %630 = vst [vmem:[#allocation2] sm:$0xf] %v629
    %631 = vst [vmem:[#allocation2 + $0x4] sm:$0xf] %v623
    %v632 = vld [vmem:[#allocation2 + $0x8] sm:$0x1]
    %v633 = vsel %vm83, %v624, %v632
    %634 = vst [vmem:[#allocation2 + $0x8] sm:$0x1] %v633
    %v635 = vld [vmem:[#allocation2] sm:$0x1]
    %v636 = vsel %vm83, %v602, %v635
    %637 = vst [vmem:[#allocation2] sm:$0x1] %v636
    %v638 = vrot.slane %v607, 7
    %v639 = vrot.slane %v638, 4
    %v641 = vld [vmem:[#allocation2 + $0x8] sm:$0x1]
    %v642 = vsel %vm93, %v639, %v641
    %643 = vst [vmem:[#allocation2 + $0x8] sm:$0x1] %v642
    %v644 = vld [vmem:[#allocation2] sm:$0xf]
    %v645 = vld [vmem:[#allocation2 + $0x4] sm:$0xf]
    %v646 = vld [vmem:[%s2] sm:$0xf]
    %v647 = vld [vmem:[%s2 + $0x4] sm:$0xf]
    %v648 = vld [vmem:[%s2 + $0x8] sm:$0xf]
    %v649 = vld [vmem:[%s2 + $0xc] sm:$0xf]
    %v650 = vld [vmem:[%s2 + $0x10] sm:$0xf]
    %v651 = vld [vmem:[%s2 + $0x14] sm:$0xf]
    %v652 = vld [vmem:[%s2 + $0x18] sm:$0xf]
    %v653 = vld [vmem:[%s2 + $0x1c] sm:$0xf]
    %v654 = vld [vmem:[%s2 + $0x20] sm:$0xf]
    %v655 = vld [vmem:[%s2 + $0x24] sm:$0xf]
    %v656 = vld [vmem:[%s2 + $0x28] sm:$0xf]
    %v657 = vld [vmem:[%s2 + $0x2c] sm:$0xf]
    %v658 = vld [vmem:[%s2 + $0x30] sm:$0xf]
    %v659 = vld [vmem:[%s2 + $0x34] sm:$0xf]
    %v660 = vld [vmem:[%s2 + $0x38] sm:$0xf]
    %v661 = vld [vmem:[%s2 + $0x3c] sm:$0xf]
    %v662 = vld [vmem:[#allocation2 + $0x8] sm:$0x1]
    %s663 = scalar_lea.vmem %s2, 64
    %v664 = vld [vmem:[%s663] sm:$0xf]
    %v665 = vld [vmem:[%s663 + $0x4] sm:$0xf]
    %v666 = vld [vmem:[%s663 + $0x8] sm:$0xf]
    %v667 = vld [vmem:[%s663 + $0xc] sm:$0xf]
    %v668 = vld [vmem:[%s663 + $0x10] sm:$0xf]
    %v669 = vld [vmem:[%s663 + $0x14] sm:$0xf]
    %v670 = vld [vmem:[%s663 + $0x18] sm:$0xf]
    %v671 = vld [vmem:[%s663 + $0x1c] sm:$0xf]
    %v672 = vld [vmem:[%s663 + $0x20] sm:$0xf]
    %v673 = vld [vmem:[%s663 + $0x24] sm:$0xf]
    %v674 = vld [vmem:[%s663 + $0x28] sm:$0xf]
    %v675 = vld [vmem:[%s663 + $0x2c] sm:$0xf]
    %v676 = vld [vmem:[%s663 + $0x30] sm:$0xf]
    %v677 = vld [vmem:[%s663 + $0x34] sm:$0xf]
    %v678 = vld [vmem:[%s663 + $0x38] sm:$0xf]
    %v679 = vld [vmem:[%s663 + $0x3c] sm:$0xf]
    %v683 = vunpack.c.l.b16 %v644
    %v684 = vunpack.c.l.b16 %v645
    %v685 = vunpack.c.l.b16 %v662
    %v686 = vpack.c.b16 %v684, %v683
    %v687 = vpack.c.b16 %v685, %v685
    %v689 = vshrl.u32 %v686, 16
    %v691 = vshll.u32 %v686, 16
    %v693 = vrot.slane %v691, 1
    %v694 = vor.u32 %v689, %v693
    %v696 = vshll.u32 %v687, 16
    %v698 = vrot.slane %v696, 1
    %v699 = vsel %vm141, %v694, %v698
    %v717 = vunpack.c.l.b16 %v664
    %v718 = vunpack.c.l.b16 %v665
    %v719 = vunpack.c.l.b16 %v666
    %v720 = vunpack.c.l.b16 %v667
    %v721 = vunpack.c.l.b16 %v668
    %v722 = vunpack.c.l.b16 %v669
    %v723 = vunpack.c.l.b16 %v670
    %v724 = vunpack.c.l.b16 %v671
    %v725 = vunpack.c.l.b16 %v672
    %v726 = vunpack.c.l.b16 %v673
    %v727 = vunpack.c.l.b16 %v674
    %v728 = vunpack.c.l.b16 %v675
    %v729 = vunpack.c.l.b16 %v676
    %v730 = vunpack.c.l.b16 %v677
    %v731 = vunpack.c.l.b16 %v678
    %v732 = vunpack.c.l.b16 %v679
    %v733 = vpack.c.b16 %v718, %v717
    %v734 = vpack.c.b16 %v720, %v719
    %v735 = vpack.c.b16 %v722, %v721
    %v736 = vpack.c.b16 %v724, %v723
    %v737 = vpack.c.b16 %v726, %v725
    %v738 = vpack.c.b16 %v728, %v727
    %v739 = vpack.c.b16 %v730, %v729
    %v740 = vpack.c.b16 %v732, %v731
    %749 = vmatprep.subr.bf16.mxu0 0
    %750 = vmatpush1.bf16.msra.mxu0 %v733
    %751 = vmatprep.subr.bf16.mxu0 0
    %752 = vmatpush1.bf16.msra.mxu0 %v734
    %753 = vmatprep.subr.bf16.mxu0 0
    %754 = vmatpush1.bf16.msra.mxu0 %v735
    %755 = vmatprep.subr.bf16.mxu0 0
    %756 = vmatpush1.bf16.msra.mxu0 %v736
    %757 = vmatprep.subr.bf16.mxu0 0
    %758 = vmatpush1.bf16.msra.mxu0 %v737
    %759 = vmatprep.subr.bf16.mxu0 0
    %760 = vmatpush1.bf16.msra.mxu0 %v738
    %761 = vmatprep.subr.bf16.mxu0 0
    %762 = vmatpush1.bf16.msra.mxu0 %v739
    %763 = vmatprep.subr.bf16.mxu0 0
    %764 = vmatpush1.bf16.msra.mxu0 %v740
    %765 = vmatprep.subr.bf16.mxu0 0
    %766 = vmatpush1.bf16.msra.mxu0 0
    %767 = vmatprep.subr.bf16.mxu0 0
    %768 = vmatpush1.bf16.msra.mxu0 0
    %769 = vmatprep.subr.bf16.mxu0 0
    %770 = vmatpush1.bf16.msra.mxu0 0
    %771 = vmatprep.subr.bf16.mxu0 0
    %772 = vmatpush1.bf16.msra.mxu0 0
    %773 = vmatprep.subr.bf16.mxu0 0
    %774 = vmatpush1.bf16.msra.mxu0 0
    %775 = vmatprep.subr.bf16.mxu0 0
    %776 = vmatpush1.bf16.msra.mxu0 0
    %777 = vmatprep.subr.bf16.mxu0 0
    %778 = vmatpush1.bf16.msra.mxu0 0
    %779 = vmatprep.subr.bf16.mxu0 0
    %780 = vmatpush1.bf16.msra.mxu0 0
    %781 = vmatprep.mubr.bf16.mxu0 0
    %782 = vmatmul.mubr.bf16.gmra.mrb[0].mxu0 %v699
    %v783 = vpop.f32.mrb[0].mxu0
    %v784 = vadd.f32 0.0, %v783
    %v785 = vpop.f32.mrb[0].mxu0
    %v786 = vpop.f32.mrb[0].mxu0
    %v787 = vadd.f32 0.0, %v786
    %v788 = vpop.f32.mrb[0].mxu0
    %789 = vdwg.mxu0
    %v807 = vunpack.c.l.b16 %v646
    %v808 = vunpack.c.l.b16 %v647
    %v809 = vunpack.c.l.b16 %v648
    %v810 = vunpack.c.l.b16 %v649
    %v811 = vunpack.c.l.b16 %v650
    %v812 = vunpack.c.l.b16 %v651
    %v813 = vunpack.c.l.b16 %v652
    %v814 = vunpack.c.l.b16 %v653
    %v815 = vunpack.c.l.b16 %v654
    %v816 = vunpack.c.l.b16 %v655
    %v817 = vunpack.c.l.b16 %v656
    %v818 = vunpack.c.l.b16 %v657
    %v819 = vunpack.c.l.b16 %v658
    %v820 = vunpack.c.l.b16 %v659
    %v821 = vunpack.c.l.b16 %v660
    %v822 = vunpack.c.l.b16 %v661
    %v823 = vpack.c.b16 %v808, %v807
    %v824 = vpack.c.b16 %v810, %v809
    %v825 = vpack.c.b16 %v812, %v811
    %v826 = vpack.c.b16 %v814, %v813
    %v827 = vpack.c.b16 %v816, %v815
    %v828 = vpack.c.b16 %v818, %v817
    %v829 = vpack.c.b16 %v820, %v819
    %v830 = vpack.c.b16 %v822, %v821
    %839 = vmatprep.subr.bf16.mxu0 0
    %840 = vmatpush1.bf16.msra.mxu0 %v823
    %841 = vmatprep.subr.bf16.mxu0 0
    %842 = vmatpush1.bf16.msra.mxu0 %v824
    %843 = vmatprep.subr.bf16.mxu0 0
    %844 = vmatpush1.bf16.msra.mxu0 %v825
    %845 = vmatprep.subr.bf16.mxu0 0
    %846 = vmatpush1.bf16.msra.mxu0 %v826
    %847 = vmatprep.subr.bf16.mxu0 0
    %848 = vmatpush1.bf16.msra.mxu0 %v827
    %849 = vmatprep.subr.bf16.mxu0 0
    %850 = vmatpush1.bf16.msra.mxu0 %v828
    %851 = vmatprep.subr.bf16.mxu0 0
    %852 = vmatpush1.bf16.msra.mxu0 %v829
    %853 = vmatprep.subr.bf16.mxu0 0
    %854 = vmatpush1.bf16.msra.mxu0 %v830
    %855 = vmatprep.subr.bf16.mxu0 0
    %856 = vmatpush1.bf16.msra.mxu0 0
    %857 = vmatprep.subr.bf16.mxu0 0
    %858 = vmatpush1.bf16.msra.mxu0 0
    %859 = vmatprep.subr.bf16.mxu0 0
    %860 = vmatpush1.bf16.msra.mxu0 0
    %861 = vmatprep.subr.bf16.mxu0 0
    %862 = vmatpush1.bf16.msra.mxu0 0
    %863 = vmatprep.subr.bf16.mxu0 0
    %864 = vmatpush1.bf16.msra.mxu0 0
    %865 = vmatprep.subr.bf16.mxu0 0
    %866 = vmatpush1.bf16.msra.mxu0 0
    %867 = vmatprep.subr.bf16.mxu0 0
    %868 = vmatpush1.bf16.msra.mxu0 0
    %869 = vmatprep.subr.bf16.mxu0 0
    %870 = vmatpush1.bf16.msra.mxu0 0
    %871 = vmatprep.mubr.bf16.mxu0 0
    %872 = vmatmul.mubr.bf16.gmra.mrb[0].mxu0 %v686
    %v873 = vpop.f32.mrb[0].mxu0
    %v874 = vadd.f32 %v784, %v873
    %v875 = vpop.f32.mrb[0].mxu0
    %v876 = vpop.f32.mrb[0].mxu0
    %v877 = vadd.f32 %v787, %v876
    %v878 = vpop.f32.mrb[0].mxu0
    %879 = vdwg.mxu0
    %v880 = vld [vmem:[#allocation2] sm:$0xe]
    %s881 = scalar_lea.vmem %s2, 128
    %v882 = vld [vmem:[%s881] sm:$0xf]
    %v883 = vld [vmem:[%s881 + $0x4] sm:$0xf]
    %v884 = vld [vmem:[%s881 + $0x8] sm:$0xf]
    %v885 = vld [vmem:[%s881 + $0xc] sm:$0xf]
    %v886 = vld [vmem:[%s881 + $0x10] sm:$0xf]
    %v887 = vld [vmem:[%s881 + $0x14] sm:$0xf]
    %v888 = vld [vmem:[%s881 + $0x18] sm:$0xf]
    %v889 = vld [vmem:[%s881 + $0x1c] sm:$0xf]
    %v890 = vld [vmem:[%s881 + $0x20] sm:$0xf]
    %v891 = vld [vmem:[%s881 + $0x24] sm:$0xf]
    %v892 = vld [vmem:[%s881 + $0x28] sm:$0xf]
    %v893 = vld [vmem:[%s881 + $0x2c] sm:$0xf]
    %v894 = vld [vmem:[%s881 + $0x30] sm:$0xf]
    %v895 = vld [vmem:[%s881 + $0x34] sm:$0xf]
    %v896 = vld [vmem:[%s881 + $0x38] sm:$0xf]
    %v897 = vld [vmem:[%s881 + $0x3c] sm:$0xf]
    %v899 = vunpack.c.l.b16 %v880
    %v900 = vpack.c.b16 %v684, %v899
    %v901 = vrot.slane %v900, 1
    %v902 = vrot.slane %v687, 1
    %v903 = vsel %vm355, %v901, %v902
    %v921 = vunpack.c.l.b16 %v882
    %v922 = vunpack.c.l.b16 %v883
    %v923 = vunpack.c.l.b16 %v884
    %v924 = vunpack.c.l.b16 %v885
    %v925 = vunpack.c.l.b16 %v886
    %v926 = vunpack.c.l.b16 %v887
    %v927 = vunpack.c.l.b16 %v888
    %v928 = vunpack.c.l.b16 %v889
    %v929 = vunpack.c.l.b16 %v890
    %v930 = vunpack.c.l.b16 %v891
    %v931 = vunpack.c.l.b16 %v892
    %v932 = vunpack.c.l.b16 %v893
    %v933 = vunpack.c.l.b16 %v894
    %v934 = vunpack.c.l.b16 %v895
    %v935 = vunpack.c.l.b16 %v896
    %v936 = vunpack.c.l.b16 %v897
    %v937 = vpack.c.b16 %v922, %v921
    %v938 = vpack.c.b16 %v924, %v923
    %v939 = vpack.c.b16 %v926, %v925
    %v940 = vpack.c.b16 %v928, %v927
    %v941 = vpack.c.b16 %v930, %v929
    %v942 = vpack.c.b16 %v932, %v931
    %v943 = vpack.c.b16 %v934, %v933
    %v944 = vpack.c.b16 %v936, %v935
    %953 = vmatprep.subr.bf16.mxu0 0
    %954 = vmatpush1.bf16.msra.mxu0 %v937
    %955 = vmatprep.subr.bf16.mxu0 0
    %956 = vmatpush1.bf16.msra.mxu0 %v938
    %957 = vmatprep.subr.bf16.mxu0 0
    %958 = vmatpush1.bf16.msra.mxu0 %v939
    %959 = vmatprep.subr.bf16.mxu0 0
    %960 = vmatpush1.bf16.msra.mxu0 %v940
    %961 = vmatprep.subr.bf16.mxu0 0
    %962 = vmatpush1.bf16.msra.mxu0 %v941
    %963 = vmatprep.subr.bf16.mxu0 0
    %964 = vmatpush1.bf16.msra.mxu0 %v942
    %965 = vmatprep.subr.bf16.mxu0 0
    %966 = vmatpush1.bf16.msra.mxu0 %v943
    %967 = vmatprep.subr.bf16.mxu0 0
    %968 = vmatpush1.bf16.msra.mxu0 %v944
    %969 = vmatprep.subr.bf16.mxu0 0
    %970 = vmatpush1.bf16.msra.mxu0 0
    %971 = vmatprep.subr.bf16.mxu0 0
    %972 = vmatpush1.bf16.msra.mxu0 0
    %973 = vmatprep.subr.bf16.mxu0 0
    %974 = vmatpush1.bf16.msra.mxu0 0
    %975 = vmatprep.subr.bf16.mxu0 0
    %976 = vmatpush1.bf16.msra.mxu0 0
    %977 = vmatprep.subr.bf16.mxu0 0
    %978 = vmatpush1.bf16.msra.mxu0 0
    %979 = vmatprep.subr.bf16.mxu0 0
    %980 = vmatpush1.bf16.msra.mxu0 0
    %981 = vmatprep.subr.bf16.mxu0 0
    %982 = vmatpush1.bf16.msra.mxu0 0
    %983 = vmatprep.subr.bf16.mxu0 0
    %984 = vmatpush1.bf16.msra.mxu0 0
    %985 = vmatprep.mubr.bf16.mxu0 0
    %986 = vmatmul.mubr.bf16.gmra.mrb[0].mxu0 %v903
    %v987 = vpop.f32.mrb[0].mxu0
    %v988 = vadd.f32 0.0, %v987
    %v989 = vpop.f32.mrb[0].mxu0
    %v990 = vpop.f32.mrb[0].mxu0
    %v991 = vadd.f32 0.0, %v990
    %v992 = vpop.f32.mrb[0].mxu0
    %993 = vdwg.mxu0
    %v994 = vadd.f32 %v874, %v988
    %v995 = vadd.f32 %v877, %v991
    %v996 = vld [vmem:[%s6] sm:$0x1]
    %v997 = vld [vmem:[%s7] sm:$0x1]
    %v998 = vadd.f32 %v994, %v995
    %v999 = vrot.slane %v998, 4
    %v1000 = vadd.f32 %v998, %v999
    %v1001 = vrot.slane %v1000, 2
    %v1002 = vadd.f32 %v1000, %v1001
    %v1003 = vrot.slane %v1002, 1
    %v1004 = vadd.f32 %v1002, %v1003
    %v1005 = vmul.f32 %v994, %v994
    %v1006 = vmul.f32 %v995, %v995
    %v1007 = vadd.f32 %v1005, %v1006
    %v1008 = vrot.slane %v1007, 4
    %v1009 = vadd.f32 %v1007, %v1008
    %v1010 = vrot.slane %v1009, 2
    %v1011 = vadd.f32 %v1009, %v1010
    %v1012 = vrot.slane %v1011, 1
    %v1013 = vadd.f32 %v1011, %v1012
    %v1014 = vsel %vm469, %v1004, %v1013
    %v1015 = vld [vmem:[#allocation3] sm:$0xff]
    %v1016 = vld [vmem:[#allocation3 + $0x8] sm:$0xff]
    %v1017 = vld [vmem:[#allocation3 + $0x10] sm:$0xff]
    %v1018 = vld [vmem:[#allocation3 + $0x18] sm:$0xff]
    %v1019 = vld [vmem:[#allocation3 + $0x20] sm:$0xff]
    %v1020 = vld [vmem:[#allocation3 + $0x28] sm:$0xff]
    %v1021 = vld [vmem:[#allocation3 + $0x30] sm:$0xff]
    %v1022 = vld [vmem:[#allocation3 + $0x38] sm:$0xff]
    %v1023 = vld [vmem:[#allocation3 + $0x40] sm:$0xff]
    %v1024 = vld [vmem:[#allocation3 + $0x48] sm:$0xff]
    %v1025 = vld [vmem:[#allocation3 + $0x50] sm:$0xff]
    %v1026 = vld [vmem:[#allocation3 + $0x58] sm:$0xff]
    %v1027 = vld [vmem:[#allocation3 + $0x60] sm:$0xff]
    %v1028 = vld [vmem:[#allocation3 + $0x68] sm:$0xff]
    %v1029 = vld [vmem:[#allocation3 + $0x70] sm:$0xff]
    %v1030 = vld [vmem:[#allocation3 + $0x78] sm:$0xff]
    %1031 = vmatprep.subr.mxu0 0.0
    %1032 = vmatpush1.msra.mxu0 %v1015
    %1033 = vmatprep.subr.mxu0 0.0
    %1034 = vmatpush1.msra.mxu0 %v1016
    %1035 = vmatprep.subr.mxu0 0.0
    %1036 = vmatpush1.msra.mxu0 %v1017
    %1037 = vmatprep.subr.mxu0 0.0
    %1038 = vmatpush1.msra.mxu0 %v1018
    %1039 = vmatprep.subr.mxu0 0.0
    %1040 = vmatpush1.msra.mxu0 %v1019
    %1041 = vmatprep.subr.mxu0 0.0
    %1042 = vmatpush1.msra.mxu0 %v1020
    %1043 = vmatprep.subr.mxu0 0.0
    %1044 = vmatpush1.msra.mxu0 %v1021
    %1045 = vmatprep.subr.mxu0 0.0
    %1046 = vmatpush1.msra.mxu0 %v1022
    %1047 = vmatprep.subr.mxu0 0.0
    %1048 = vmatpush1.msra.mxu0 %v1023
    %1049 = vmatprep.subr.mxu0 0.0
    %1050 = vmatpush1.msra.mxu0 %v1024
    %1051 = vmatprep.subr.mxu0 0.0
    %1052 = vmatpush1.msra.mxu0 %v1025
    %1053 = vmatprep.subr.mxu0 0.0
    %1054 = vmatpush1.msra.mxu0 %v1026
    %1055 = vmatprep.subr.mxu0 0.0
    %1056 = vmatpush1.msra.mxu0 %v1027
    %1057 = vmatprep.subr.mxu0 0.0
    %1058 = vmatpush1.msra.mxu0 %v1028
    %1059 = vmatprep.subr.mxu0 0.0
    %1060 = vmatpush1.msra.mxu0 %v1029
    %1061 = vmatprep.subr.mxu0 0.0
    %1062 = vmatpush1.msra.mxu0 %v1030
    %1063 = vmatprep.subr.mxu0 0.0
    %1064 = vmatpush1.msra.mxu0 0.0
    %1065 = vmatprep.subr.mxu0 0.0
    %1066 = vmatpush1.msra.mxu0 0.0
    %1067 = vmatprep.subr.mxu0 0.0
    %1068 = vmatpush1.msra.mxu0 0.0
    %1069 = vmatprep.subr.mxu0 0.0
    %1070 = vmatpush1.msra.mxu0 0.0
    %1071 = vmatprep.subr.mxu0 0.0
    %1072 = vmatpush1.msra.mxu0 0.0
    %1073 = vmatprep.subr.mxu0 0.0
    %1074 = vmatpush1.msra.mxu0 0.0
    %1075 = vmatprep.subr.mxu0 0.0
    %1076 = vmatpush1.msra.mxu0 0.0
    %1077 = vmatprep.subr.mxu0 0.0
    %1078 = vmatpush1.msra.mxu0 0.0
    %1079 = vmatprep.subr.mxu0 0.0
    %1080 = vmatpush1.msra.mxu0 0.0
    %1081 = vmatprep.subr.mxu0 0.0
    %1082 = vmatpush1.msra.mxu0 0.0
    %1083 = vmatprep.subr.mxu0 0.0
    %1084 = vmatpush1.msra.mxu0 0.0
    %1085 = vmatprep.subr.mxu0 0.0
    %1086 = vmatpush1.msra.mxu0 0.0
    %1087 = vmatprep.subr.mxu0 0.0
    %1088 = vmatpush1.msra.mxu0 0.0
    %1089 = vmatprep.subr.mxu0 0.0
    %1090 = vmatpush1.msra.mxu0 0.0
    %1091 = vmatprep.subr.mxu0 0.0
    %1092 = vmatpush1.msra.mxu0 0.0
    %1093 = vmatprep.subr.mxu0 0.0
    %1094 = vmatpush1.msra.mxu0 0.0
    %1095 = vmatprep.mubr.f32.mxu0 0.0
    %1096 = vmatmul.mubr.f32.gmra.mrb[0].mxu0 %v1014
    %v1097 = vpop.f32.mrb[0].mxu0
    %v1098 = vadd.f32 0.0, %v1097
    %v1099 = vpop.f32.mrb[0].mxu0
    %1100 = vdwg.mxu0
    %v1101 = vmul.f32 %v1098, %v1098
    %v1103 = vrot.slane %v1101, 7
    %v1105 = vsub.f32 %v1098, %v1103
    %v1106 = vadd.f32 %v1105, 1e-05
    %v1107 = vrsqrt.pop %v1106
    %v1110 = vunpack.c.l.s4 1966171168
    %v1111 = vunpack.c.0.s8 %v1110
    %v1112 = vlaneseq
    %v1113 = vshrl.u32 %v1112, 7
    %v1114 = vsub.s32 %v1111, %v1113
    %v1115 = vrot.slane %v1107, %v1114
    %v1116 = vcombine.high %v1115, %v1115
    %v1118 = vunpack.c.l.s4 1966171168
    %v1119 = vunpack.c.0.s8 %v1118
    %v1120 = vlaneseq
    %v1121 = vshrl.u32 %v1120, 7
    %v1122 = vsub.s32 %v1119, %v1121
    %v1123 = vrot.slane %v1116, %v1122
    %v1125 = vmul.f32 %v996, %v1123
    %v1126 = vmul.f32 %v1098, %v1125
    %v1127 = vsub.f32 %v997, %v1126
    %v1129 = vlaneseq
    %v1130 = vshrl.u32 %v1129, 7
    %v1131 = vsub.s32 0, %v1130
    %v1132 = vrot.slane %v1125, %v1131
    %v1134 = vmul.f32 %v994, %v1132
    %v1135 = vmul.f32 %v995, %v1132
    %v1137 = vlaneseq
    %v1138 = vshrl.u32 %v1137, 7
    %v1139 = vsub.s32 0, %v1138
    %v1140 = vrot.slane %v1127, %v1139
    %v1142 = vadd.f32 %v1134, %v1140
    %v1143 = vadd.f32 %v1135, %v1140
    %v1144 = vadd.f32 %v1142, %v44
    %v1145 = vadd.f32 %v1143, %v45
    %v1146 = vmax.f32 %v1144, 0.0
    %v1147 = vmax.f32 %v1145, 0.0
    %1148 = vst [vmem:[%s8] sm:$0xff] %v1146
    %1149 = vst [vmem:[%s8 + $0x8] sm:$0xff] %v1147
    // Predicated region
    $region38: #{residual_block.1} parent=1 // pred_check
      _
    $region39: #{residual_block.1} parent=1 // pred_check_branch
      %1151 = sbr.rel (0) target = $region41
    $region40: #{residual_block.1} parent=1 // pred_region
      _
    $region41: #{residual_block.1} parent=1 // pred_fallthru
      _
    // Predicated region
    $region42: #{residual_block.1} parent=1 // pred_check
      _
    $region43: #{residual_block.1} parent=1 // pred_check_branch
      %1153 = sbr.rel (0) target = $region45
    $region44: #{residual_block.1} parent=1 // pred_region
      _
    $region45: #{residual_block.1} parent=1 // pred_fallthru
      _
    %1154 = vsyncpa [#allocation4], 1

</llo_original>
